<compile_context>
chip_gen: v7x
topology: tpu7x:2x2x1
jax: 0.10.0
libtpu: 0.0.40
codegen_flags: <defaults>
</compile_context>

<pallas_src>
import math

import numpy as np
import jax
import jax.numpy as jnp
from jax.experimental import pallas as pl
from jax.experimental.pallas import tpu as pltpu

# ---------------- quadkey helpers ---------------------------------------------------------------
MaxLatitude = 85.05112878
MaxLongitude = 180
MinLatitude = -85.05112878
MinLongitude = -180


def clip(n, minValue, maxValue):
    return min(max(n, minValue), maxValue)


def map_size(levelOfDetail):
    return 256 << levelOfDetail


def latlng2pxy(latitude, longitude, levelOfDetail):
    latitude = clip(latitude, MinLatitude, MaxLatitude)
    longitude = clip(longitude, MinLongitude, MaxLongitude)
    x = (longitude + 180) / 360
    sinLatitude = math.sin(latitude * math.pi / 180)
    y = 0.5 - math.log((1 + sinLatitude) / (1 - sinLatitude)) / (4 * math.pi)
    ms = map_size(levelOfDetail)
    pixelX = int(clip(x * ms + 0.5, 0, ms - 1))
    pixelY = int(clip(y * ms + 0.5, 0, ms - 1))
    return (pixelX, pixelY)


def pxy2txy(pixelX, pixelY):
    return (pixelX // 256, pixelY // 256)


def txy2quadkey(tileX, tileY, levelOfDetail):
    quadKey = []
    for i in range(levelOfDetail, 0, -1):
        digit = 0
        mask = 1 << (i - 1)
        if tileX & mask != 0:
            digit += 1
        if tileY & mask != 0:
            digit += 2
        quadKey.append(str(digit))
    return "".join(quadKey)


def latlng2quadkey(lat, lng, level=25):
    pixelX, pixelY = latlng2pxy(lat, lng, level)
    tileX, tileY = pxy2txy(pixelX, pixelY)
    return txy2quadkey(tileX, tileY, level)


def latlng2quadkey_digits(lats, lngs, level=25):
    """Vectorized (numpy) batch version of latlng2quadkey: (N,) lat/lng -> (N, level) f32 digits."""
    # TODO(synk): the 2^33-range integer bit ops need 64-bit ints, so this stays in host numpy
    # rather than on-device jnp (JAX x64 is off by default and f64/i64 are emulated on TPU).
    lats = np.clip(np.asarray(lats, dtype=np.float64), MinLatitude, MaxLatitude)
    lngs = np.clip(np.asarray(lngs, dtype=np.float64), MinLongitude, MaxLongitude)
    x = (lngs + 180.0) / 360.0
    sin_lat = np.sin(lats * np.pi / 180.0)
    y = 0.5 - np.log((1.0 + sin_lat) / (1.0 - sin_lat)) / (4.0 * np.pi)
    ms = map_size(level)
    px = np.clip(x * ms + 0.5, 0, ms - 1).astype(np.int64)   # trunc toward zero == Python int()
    py = np.clip(y * ms + 0.5, 0, ms - 1).astype(np.int64)
    tx = px // 256
    ty = py // 256
    shifts = np.arange(level - 1, -1, -1, dtype=np.int64)     # bit (level-1) first, bit 0 last
    bx = (tx[:, None] >> shifts[None, :]) & 1
    by = (ty[:, None] >> shifts[None, :]) & 1
    return (bx + 2 * by).astype(np.float32)                   # (N, level)


# ---------------- Pallas kernel ------------------------------------------------------------------
def _fourier_pe_kernel(x_ref, wr_ref, w1c_ref, w1s_ref, b1_ref, w2_ref, b2_ref, o_ref):
    # x (TN, M) f32 ; Wr (M, F/2) bf16 ; W1_cos/W1_sin (F/2, H) bf16 (1/sqrt(F) pre-folded);
    # b1 (1, H) f32 ; W2 (H, D) bf16 ; b2 (1, D) f32 ; out (TN, D) f32.
    x = x_ref[...].astype(jnp.bfloat16)                                            # in-kernel cast
    proj = jnp.dot(x, wr_ref[...], preferred_element_type=jnp.float32)             # (TN, F/2) f32
    c = jnp.cos(proj)                                                               # f32 elementwise
    s = jnp.sin(proj)
    # Split-weight form of  (1/sqrt(F)) * [cos, sin] @ W1  -- no lane-axis concat.
    h = (jnp.dot(c.astype(jnp.bfloat16), w1c_ref[...], preferred_element_type=jnp.float32)
         + jnp.dot(s.astype(jnp.bfloat16), w1s_ref[...], preferred_element_type=jnp.float32)
         + b1_ref[...])
    h = jax.nn.gelu(h, approximate=True)          # tanh GELU: routed to EUP slot, off the VALU
    y = jnp.dot(h.astype(jnp.bfloat16), w2_ref[...], preferred_element_type=jnp.float32) + b2_ref[...]
    o_ref[...] = y.astype(o_ref.dtype)


def _choose_tile(n):
    """Row-tile for the batch axis.

    n <= 128 : one block == full array (legal regardless of 8/16 divisibility; no masking).
    else     : split in half (grid >= 2 so both v7x TensorCores get work), round to a multiple
               of 16 (bf16 sublane packing), cap at 2048 rows (~10 MiB per-tile VMEM footprint,
               comfortably inside the 32 MiB scoped-VMEM limit we request).
    """
    if n <= 128:
        return max(n, 1)
    half16 = ((pl.cdiv(n, 2) + 15) // 16) * 16
    return min(2048, half16)


@jax.jit
def _fourier_pe(x, wr, w1c, w1s, b1, w2, b2):
    """x: (N, M) f32 -> (N, D) f32.  Tiled over N; weights VMEM-resident via constant index_map."""
    n, m = x.shape
    f2 = wr.shape[1]
    h_dim = w1c.shape[1]
    d = w2.shape[1]

    tn = _choose_tile(n)
    grid = (pl.cdiv(n, tn),)       # partial last block handled by Pallas masking (no pad / slice)

    w_bytes = (wr.size + w1c.size + w1s.size + w2.size) * 2 + (b1.size + b2.size) * 4
    cost = pl.CostEstimate(
        flops=2 * n * (m * f2 + 2 * f2 * h_dim + h_dim * d),
        transcendentals=3 * n * f2,                       # cos + sin + tanh(GELU) per row
        bytes_accessed=n * (m * 4 + d * 4) + w_bytes,
    )

    return pl.pallas_call(
        _fourier_pe_kernel,
        out_shape=jax.ShapeDtypeStruct((n, d), jnp.float32),
        grid=grid,
        in_specs=[
            pl.BlockSpec((tn, m), lambda i: (i, 0)),        # x tile streams over the batch
            pl.BlockSpec((m, f2), lambda i: (0, 0)),        # weights: constant block -> resident
            pl.BlockSpec((f2, h_dim), lambda i: (0, 0)),
            pl.BlockSpec((f2, h_dim), lambda i: (0, 0)),
            pl.BlockSpec((1, h_dim), lambda i: (0, 0)),
            pl.BlockSpec((h_dim, d), lambda i: (0, 0)),
            pl.BlockSpec((1, d), lambda i: (0, 0)),
        ],
        out_specs=pl.BlockSpec((tn, d), lambda i: (i, 0)),
        compiler_params=pltpu.CompilerParams(
            dimension_semantics=("parallel",),
            vmem_limit_bytes=32 * 1024 * 1024,
        ),
        cost_estimate=cost,
    )(x, wr, w1c, w1s, b1, w2, b2)


# ---------------- module wrapper ------------------------------------------------------------------
class GPSPositionalEncoderPallas:
    def __init__(self, M=25, F_dim=256, H_dim=128, D=128, gamma=10.0, key=None):
        self.G, self.M, self.F_dim, self.H_dim, self.D, self.gamma = 1, M, F_dim, H_dim, D, gamma
        if key is None:
            key = jax.random.PRNGKey(0)
        k_wr, k_w1, k_b1, k_w2, k_b2 = jax.random.split(key, 5)

        # f32 master weights, mirroring the PyTorch init semantics:
        #   Wr ~ Normal(0, std=gamma^-2), stored (in, out) = transpose of nn.Linear's (out, in)
        self.Wr_f32 = (gamma ** (-2)) * jax.random.normal(k_wr, (M, F_dim // 2), jnp.float32)
        lim1 = 1.0 / math.sqrt(F_dim)
        self.W1_f32 = jax.random.uniform(k_w1, (F_dim, H_dim), jnp.float32, -lim1, lim1)
        self.b1_f32 = jax.random.uniform(k_b1, (1, H_dim), jnp.float32, -lim1, lim1)
        lim2 = 1.0 / math.sqrt(H_dim)
        self.W2_f32 = jax.random.uniform(k_w2, (H_dim, D // self.G), jnp.float32, -lim2, lim2)
        self.b2_f32 = jax.random.uniform(k_b2, (1, D // self.G), jnp.float32, -lim2, lim2)

        # Device-resident kernel parameters: bf16 weights (fast MXU path), f32 biases.
        # W1 is split into cos/sin halves with the 1/sqrt(F) scale folded in (no in-kernel concat).
        scale = 1.0 / math.sqrt(F_dim)
        self.Wr = self.Wr_f32.astype(jnp.bfloat16)
        self.W1c = (scale * self.W1_f32[: F_dim // 2]).astype(jnp.bfloat16)
        self.W1s = (scale * self.W1_f32[F_dim // 2:]).astype(jnp.bfloat16)
        self.b1 = self.b1_f32
        self.W2 = self.W2_f32.astype(jnp.bfloat16)
        self.b2 = self.b2_f32

    def __call__(self, latitude, longitude):
        """Accepts scalars (like the PyTorch module) or equal-length batches of lat/lng.
        Returns (N, D) float32 positional encodings (N=1 for scalar inputs)."""
        lats = np.atleast_1d(np.asarray(latitude, dtype=np.float64))
        lngs = np.atleast_1d(np.asarray(longitude, dtype=np.float64))
        digits = latlng2quadkey_digits(lats, lngs, level=self.M)         # host numpy glue, (N, M)
        x = jnp.asarray(digits, dtype=jnp.float32)                       # bf16 cast happens in-kernel
        return _fourier_pe(x, self.Wr, self.W1c, self.W1s, self.b1, self.W2, self.b2)


# ---------------- f32 reference (original module math, unquantized weights) ------------------------
def _reference_f32(x, wr, w1, b1, w2, b2, F_dim):
    hp = jax.lax.Precision.HIGHEST
    proj = jnp.dot(x, wr, precision=hp)
    f = (1.0 / math.sqrt(F_dim)) * jnp.concatenate([jnp.cos(proj), jnp.sin(proj)], axis=-1)
    h = jax.nn.gelu(jnp.dot(f, w1, precision=hp) + b1, approximate=False)
    return jnp.dot(h, w2, precision=hp) + b2


if __name__ == "__main__":
    key = jax.random.PRNGKey(0)
    k_params, k_lat, k_lng = jax.random.split(key, 3)

    enc = GPSPositionalEncoderPallas(M=25, F_dim=256, H_dim=128, D=128, gamma=10.0, key=k_params)

    # Small deterministic batch of coordinates.
    batch = 16
    lats = np.asarray(jax.random.uniform(k_lat, (batch,), minval=-60.0, maxval=60.0))
    lngs = np.asarray(jax.random.uniform(k_lng, (batch,), minval=-170.0, maxval=170.0))

    pex = enc(lats, lngs)
    pex = jax.block_until_ready(pex)
    assert pex.shape == (batch, 128) and pex.dtype == jnp.float32

    # 1) host glue parity: vectorized digit path == original per-coordinate string path
    digits_vec = latlng2quadkey_digits(lats, lngs, level=enc.M)
    digits_ref = np.asarray(
        [[int(c) for c in latlng2quadkey(float(a), float(o), level=enc.M)]
         for a, o in zip(lats, lngs)], dtype=np.float32)
    assert np.array_equal(digits_vec, digits_ref), "quadkey digit mismatch vs scalar path"

    # 2) numerical parity vs pure-JAX f32 reference (bf16 weights + tanh-GELU => relaxed tolerance;
    #    hidden activations are small (|h| << 1) so the tanh-GELU delta is negligible there).
    x_ref = jnp.asarray(digits_vec, dtype=jnp.float32)
    ref = _reference_f32(x_ref, enc.Wr_f32, enc.W1_f32, enc.b1_f32, enc.W2_f32, enc.b2_f32, enc.F_dim)
    assert jnp.allclose(pex, ref, atol=5e-3, rtol=5e-3), "mismatch vs f32 reference"

    # 3) scalar-call path (original GPSPositionalEncoder.forward signature) still works.
    single = jax.block_until_ready(enc(float(lats[0]), float(lngs[0])))
    assert single.shape == (1, 128)
    assert jnp.allclose(single[0], pex[0], atol=1e-5, rtol=1e-5)

    print("KERNEL_OK")
</pallas_src>

<mosaic_0001>
module attributes {stable_mosaic.version = 11 : i64} {
  func.func @_fourier_pe_kernel(%arg0: i32, %arg1: memref<16x25xf32, #tpu.memory_space<vmem>>, %arg2: memref<25x128xbf16, #tpu.memory_space<vmem>>, %arg3: memref<128x128xbf16, #tpu.memory_space<vmem>>, %arg4: memref<128x128xbf16, #tpu.memory_space<vmem>>, %arg5: memref<1x128xf32, #tpu.memory_space<vmem>>, %arg6: memref<128x128xbf16, #tpu.memory_space<vmem>>, %arg7: memref<1x128xf32, #tpu.memory_space<vmem>>, %arg8: memref<16x128xf32, #tpu.memory_space<vmem>>) attributes {dimension_semantics = [#tpu.dimension_semantics<parallel>], iteration_bounds = array<i64: 1>, scalar_prefetch = 0 : i64, scratch_operands = 0 : i64, tpu.core_type = #tpu.core_type<tc>, window_params = [{transform_indices = @transform_0, window_bounds = array<i64: 16, 25>}, {pipeline_mode = #tpu.pipeline_mode<synchronous>, transform_indices = @transform_1, window_bounds = array<i64: 25, 128>}, {pipeline_mode = #tpu.pipeline_mode<synchronous>, transform_indices = @transform_2, window_bounds = array<i64: 128, 128>}, {pipeline_mode = #tpu.pipeline_mode<synchronous>, transform_indices = @transform_3, window_bounds = array<i64: 128, 128>}, {pipeline_mode = #tpu.pipeline_mode<synchronous>, transform_indices = @transform_4, window_bounds = array<i64: 1, 128>}, {pipeline_mode = #tpu.pipeline_mode<synchronous>, transform_indices = @transform_5, window_bounds = array<i64: 128, 128>}, {pipeline_mode = #tpu.pipeline_mode<synchronous>, transform_indices = @transform_6, window_bounds = array<i64: 1, 128>}, {transform_indices = @transform_7, window_bounds = array<i64: 16, 128>}]} {
    %c0 = arith.constant 0 : index
    %c0_0 = arith.constant 0 : index
    %0 = vector.load %arg1[%c0, %c0_0] : memref<16x25xf32, #tpu.memory_space<vmem>>, vector<16x25xf32>
    %1 = arith.truncf %0 : vector<16x25xf32> to vector<16x25xbf16>
    %c0_1 = arith.constant 0 : index
    %c0_2 = arith.constant 0 : index
    %2 = vector.load %arg2[%c0_1, %c0_2] : memref<25x128xbf16, #tpu.memory_space<vmem>>, vector<25x128xbf16>
    %cst = arith.constant dense<0.000000e+00> : vector<16x128xf32>
    %3 = tpu.matmul %1, %2, %cst {dimension_numbers = #tpu.dot_dimension_numbers<[1], [0], [0], [1], [0, 0, 1, 1], [], []>} : vector<16x25xbf16>, vector<25x128xbf16>, vector<16x128xf32> -> vector<16x128xf32>
    %4 = math.cos %3 : vector<16x128xf32>
    %5 = math.sin %3 : vector<16x128xf32>
    %6 = arith.truncf %4 : vector<16x128xf32> to vector<16x128xbf16>
    %c0_3 = arith.constant 0 : index
    %c0_4 = arith.constant 0 : index
    %7 = vector.load %arg3[%c0_3, %c0_4] : memref<128x128xbf16, #tpu.memory_space<vmem>>, vector<128x128xbf16>
    %cst_5 = arith.constant dense<0.000000e+00> : vector<16x128xf32>
    %8 = tpu.matmul %6, %7, %cst_5 {dimension_numbers = #tpu.dot_dimension_numbers<[1], [0], [0], [1], [0, 0, 1, 1], [], []>} : vector<16x128xbf16>, vector<128x128xbf16>, vector<16x128xf32> -> vector<16x128xf32>
    %9 = arith.truncf %5 : vector<16x128xf32> to vector<16x128xbf16>
    %c0_6 = arith.constant 0 : index
    %c0_7 = arith.constant 0 : index
    %10 = vector.load %arg4[%c0_6, %c0_7] : memref<128x128xbf16, #tpu.memory_space<vmem>>, vector<128x128xbf16>
    %cst_8 = arith.constant dense<0.000000e+00> : vector<16x128xf32>
    %11 = tpu.matmul %9, %10, %cst_8 {dimension_numbers = #tpu.dot_dimension_numbers<[1], [0], [0], [1], [0, 0, 1, 1], [], []>} : vector<16x128xbf16>, vector<128x128xbf16>, vector<16x128xf32> -> vector<16x128xf32>
    %12 = arith.addf %8, %11 : vector<16x128xf32>
    %c0_9 = arith.constant 0 : index
    %c0_10 = arith.constant 0 : index
    %13 = vector.load %arg5[%c0_9, %c0_10] : memref<1x128xf32, #tpu.memory_space<vmem>>, vector<1x128xf32>
    %14 = vector.broadcast %13 : vector<1x128xf32> to vector<16x128xf32>
    %15 = arith.addf %12, %14 : vector<16x128xf32>
    %16 = arith.mulf %15, %15 : vector<16x128xf32>
    %17 = arith.mulf %15, %16 : vector<16x128xf32>
    %cst_11 = arith.constant 4.471500e-02 : f32
    %18 = vector.broadcast %cst_11 : f32 to vector<16x128xf32>
    %19 = arith.mulf %18, %17 : vector<16x128xf32>
    %20 = arith.addf %15, %19 : vector<16x128xf32>
    %cst_12 = arith.constant 0.797884583 : f32
    %21 = vector.broadcast %cst_12 : f32 to vector<16x128xf32>
    %22 = arith.mulf %21, %20 : vector<16x128xf32>
    %23 = math.tanh %22 : vector<16x128xf32>
    %cst_13 = arith.constant 1.000000e+00 : f32
    %24 = vector.broadcast %cst_13 : f32 to vector<16x128xf32>
    %25 = arith.addf %24, %23 : vector<16x128xf32>
    %cst_14 = arith.constant 5.000000e-01 : f32
    %26 = vector.broadcast %cst_14 : f32 to vector<16x128xf32>
    %27 = arith.mulf %26, %25 : vector<16x128xf32>
    %28 = arith.mulf %15, %27 : vector<16x128xf32>
    %29 = arith.truncf %28 : vector<16x128xf32> to vector<16x128xbf16>
    %c0_15 = arith.constant 0 : index
    %c0_16 = arith.constant 0 : index
    %30 = vector.load %arg6[%c0_15, %c0_16] : memref<128x128xbf16, #tpu.memory_space<vmem>>, vector<128x128xbf16>
    %cst_17 = arith.constant dense<0.000000e+00> : vector<16x128xf32>
    %31 = tpu.matmul %29, %30, %cst_17 {dimension_numbers = #tpu.dot_dimension_numbers<[1], [0], [0], [1], [0, 0, 1, 1], [], []>} : vector<16x128xbf16>, vector<128x128xbf16>, vector<16x128xf32> -> vector<16x128xf32>
    %c0_18 = arith.constant 0 : index
    %c0_19 = arith.constant 0 : index
    %32 = vector.load %arg7[%c0_18, %c0_19] : memref<1x128xf32, #tpu.memory_space<vmem>>, vector<1x128xf32>
    %33 = vector.broadcast %32 : vector<1x128xf32> to vector<16x128xf32>
    %34 = arith.addf %31, %33 : vector<16x128xf32>
    %c0_20 = arith.constant 0 : index
    %c0_21 = arith.constant 0 : index
    %35 = vector.load %arg8[%c0_20, %c0_21] : memref<16x128xf32, #tpu.memory_space<vmem>>, vector<16x128xf32>
    tpu.vector_store %arg8[%c0_20, %c0_21], %34 {strides = array<i32>} : memref<16x128xf32, #tpu.memory_space<vmem>>, vector<16x128xf32>,
    return
  }
  func.func @transform_0(%arg0: i32) -> (i32, i32) {
    %c0_i32 = arith.constant 0 : i32
    %c0_i32_0 = arith.constant 0 : i32
    return %arg0, %c0_i32 : i32, i32
  }
  func.func @transform_1(%arg0: i32) -> (i32, i32) {
    %c0_i32 = arith.constant 0 : i32
    %c0_i32_0 = arith.constant 0 : i32
    %c0_i32_1 = arith.constant 0 : i32
    return %c0_i32, %c0_i32_0 : i32, i32
  }
  func.func @transform_2(%arg0: i32) -> (i32, i32) {
    %c0_i32 = arith.constant 0 : i32
    %c0_i32_0 = arith.constant 0 : i32
    %c0_i32_1 = arith.constant 0 : i32
    return %c0_i32, %c0_i32_0 : i32, i32
  }
  func.func @transform_3(%arg0: i32) -> (i32, i32) {
    %c0_i32 = arith.constant 0 : i32
    %c0_i32_0 = arith.constant 0 : i32
    %c0_i32_1 = arith.constant 0 : i32
    return %c0_i32, %c0_i32_0 : i32, i32
  }
  func.func @transform_4(%arg0: i32) -> (i32, i32) {
    %c0_i32 = arith.constant 0 : i32
    %c0_i32_0 = arith.constant 0 : i32
    %c0_i32_1 = arith.constant 0 : i32
    return %c0_i32, %c0_i32_0 : i32, i32
  }
  func.func @transform_5(%arg0: i32) -> (i32, i32) {
    %c0_i32 = arith.constant 0 : i32
    %c0_i32_0 = arith.constant 0 : i32
    %c0_i32_1 = arith.constant 0 : i32
    return %c0_i32, %c0_i32_0 : i32, i32
  }
  func.func @transform_6(%arg0: i32) -> (i32, i32) {
    %c0_i32 = arith.constant 0 : i32
    %c0_i32_0 = arith.constant 0 : i32
    %c0_i32_1 = arith.constant 0 : i32
    return %c0_i32, %c0_i32_0 : i32, i32
  }
  func.func @transform_7(%arg0: i32) -> (i32, i32) {
    %c0_i32 = arith.constant 0 : i32
    %c0_i32_0 = arith.constant 0 : i32
    return %arg0, %c0_i32 : i32, i32
  }
}

</mosaic_0001>

<llo_original>
// kernel: _fourier_pe.1
$region0: #{_fourier_pe.1}
  #allocation0 [shape = 'u32[]', space=smem, size = 0x4, offset = 0x4, fixed_abs, tag = 'smem constant byte address 0x4 - core index']
  #allocation1 [shape = 'u32[144,128]{1,0:T(1,128)}', space=vmem, size = 0x12000, scoped, tag = 'internal scratch']
  %s0 = inlined_call_operand.hbm [shape: f32[16,25], index: 0, kind: input, shape index: {}]
  %s1 = inlined_call_operand.hbm [shape: bf16[25,128], index: 1, kind: input, shape index: {}]
  %s2 = inlined_call_operand.hbm [shape: bf16[128,128], index: 2, kind: input, shape index: {}]
  %s3 = inlined_call_operand.hbm [shape: bf16[128,128], index: 3, kind: input, shape index: {}]
  %s4 = inlined_call_operand.vmem [shape: f32[1,128], index: 4, kind: input, shape index: {}]
  %s5 = inlined_call_operand.hbm [shape: bf16[128,128], index: 5, kind: input, shape index: {}]
  %s6 = inlined_call_operand.vmem [shape: f32[1,128], index: 6, kind: input, shape index: {}]
  %s7 = inlined_call_operand.hbm [shape: f32[16,128], index: 7, kind: output, shape index: {}]
  %s8 = sld [smem:[#allocation0]]
  $region58: #{_fourier_pe.1} parent=0
    _
  %s10 = ssub.s32 1, %s8
  %s11 = scalar_select 0, %s10, %s8
  $region1: #{_fourier_pe.1} parent=0
    #allocation2 [shape = 'u8[8192]{0}', space=vmem, size = 0x2000, scoped, tag = 'input window, operand 0, single buffered']
    #allocation3 [shape = 's32[1]{0}', space=sflag, size = 0x4, scoped, tag = 'scoped memory for _fourier_pe.1']
    #allocation4 [shape = 's32[1]{0}', space=sflag, size = 0x4, scoped, tag = 'scoped memory for _fourier_pe.1']
    #allocation5 [shape = 'u8[8192]{0}', space=vmem, size = 0x2000, scoped, tag = 'input window, operand 1, single buffered']
    #allocation6 [shape = 's32[1]{0}', space=sflag, size = 0x4, scoped, tag = 'scoped memory for _fourier_pe.1']
    #allocation7 [shape = 'u8[32768]{0}', space=vmem, size = 0x8000, scoped, tag = 'input window, operand 2, single buffered']
    #allocation8 [shape = 'u8[32768]{0}', space=vmem, size = 0x8000, scoped, tag = 'input window, operand 3, single buffered']
    #allocation9 [shape = 's32[1]{0}', space=sflag, size = 0x4, scoped, tag = 'scoped memory for _fourier_pe.1']
    #allocation10 [shape = 'u8[32768]{0}', space=vmem, size = 0x8000, scoped, tag = 'input window, operand 5, single buffered']
    #allocation11 [shape = 'u8[8192]{0}', space=vmem, size = 0x2000, scoped, tag = 'output window, operand 0, single buffered']
    %12 = vsyncpa [#allocation3], 0
    %13 = vsyncpa [#allocation6], 0
    %14 = vsyncpa [#allocation9], 0
    %15 = vsyncpa [#allocation4], 0
    // Predicated region
    $region2: #{_fourier_pe.1} parent=1 // pred_check
      _
    $region3: #{_fourier_pe.1} parent=1 // pred_check_branch
      %17 = sbr.rel (0) target = $region5
    $region4: #{_fourier_pe.1} parent=1 // pred_region
      %s19 = ssub.s32 256, 256
      %20 = vsyncadd [#allocation3], %s19
      %s21 = sshll.u32 [#allocation2], 4
      %s22 = int_to_ptr.vmem [resolvable:$true] %s21
      %27 = dma.hbm_to_vmem [thread:$0]  %s0, 256, %s22, [#allocation3], 128, 128, 8
    $region5: #{_fourier_pe.1} parent=1 // pred_fallthru
      _
    // Predicated region
    $region6: #{_fourier_pe.1} parent=1 // pred_check
      _
    $region7: #{_fourier_pe.1} parent=1 // pred_check_branch
      %29 = sbr.rel (0) target = $region9
    $region8: #{_fourier_pe.1} parent=1 // pred_region
      %s31 = ssub.s32 256, 256
      %32 = vsyncadd [#allocation6], %s31
      %s33 = sshll.u32 [#allocation5], 4
      %s34 = int_to_ptr.vmem [resolvable:$true] %s33
      %39 = dma.hbm_to_vmem [thread:$0]  %s1, 256, %s34, [#allocation6], 64, 64, 4
    $region9: #{_fourier_pe.1} parent=1 // pred_fallthru
      _
    // Predicated region
    $region10: #{_fourier_pe.1} parent=1 // pred_check
      _
    $region11: #{_fourier_pe.1} parent=1 // pred_check_branch
      %41 = sbr.rel (0) target = $region13
    $region12: #{_fourier_pe.1} parent=1 // pred_region
      %s43 = ssub.s32 1024, 1024
      %44 = vsyncadd [#allocation6], %s43
      %s45 = sshll.u32 [#allocation7], 4
      %s46 = int_to_ptr.vmem [resolvable:$true] %s45
      %51 = dma.hbm_to_vmem [thread:$0]  %s2, 1024, %s46, [#allocation6], 64, 64, 4
    $region13: #{_fourier_pe.1} parent=1 // pred_fallthru
      _
    // Predicated region
    $region14: #{_fourier_pe.1} parent=1 // pred_check
      _
    $region15: #{_fourier_pe.1} parent=1 // pred_check_branch
      %53 = sbr.rel (0) target = $region17
    $region16: #{_fourier_pe.1} parent=1 // pred_region
      %s55 = ssub.s32 1024, 1024
      %56 = vsyncadd [#allocation9], %s55
      %s57 = sshll.u32 [#allocation8], 4
      %s58 = int_to_ptr.vmem [resolvable:$true] %s57
      %63 = dma.hbm_to_vmem [thread:$0]  %s3, 1024, %s58, [#allocation9], 64, 64, 4
    $region17: #{_fourier_pe.1} parent=1 // pred_fallthru
      _
    // Predicated region
    $region18: #{_fourier_pe.1} parent=1 // pred_check
      _
    $region19: #{_fourier_pe.1} parent=1 // pred_check_branch
      %65 = sbr.rel (0) target = $region21
    $region20: #{_fourier_pe.1} parent=1 // pred_region
      _
    $region21: #{_fourier_pe.1} parent=1 // pred_fallthru
      _
    // Predicated region
    $region22: #{_fourier_pe.1} parent=1 // pred_check
      _
    $region23: #{_fourier_pe.1} parent=1 // pred_check_branch
      %67 = sbr.rel (0) target = $region25
    $region24: #{_fourier_pe.1} parent=1 // pred_region
      %s69 = ssub.s32 1024, 1024
      %70 = vsyncadd [#allocation9], %s69
      %s71 = sshll.u32 [#allocation10], 4
      %s72 = int_to_ptr.vmem [resolvable:$true] %s71
      %77 = dma.hbm_to_vmem [thread:$0]  %s5, 1024, %s72, [#allocation9], 64, 64, 4
    $region25: #{_fourier_pe.1} parent=1 // pred_fallthru
      _
    // Predicated region
    $region26: #{_fourier_pe.1} parent=1 // pred_check
      _
    $region27: #{_fourier_pe.1} parent=1 // pred_check_branch
      %79 = sbr.rel (0) target = $region29
    $region28: #{_fourier_pe.1} parent=1 // pred_region
      _
    $region29: #{_fourier_pe.1} parent=1 // pred_fallthru
      _
    // Predicated region
    $region30: #{_fourier_pe.1} parent=1 // pred_check
      _
    $region31: #{_fourier_pe.1} parent=1 // pred_check_branch
      %81 = sbr.rel (0) target = $region33
    $region32: #{_fourier_pe.1} parent=1 // pred_region
      %82 = dma.done [#allocation3], 256
    $region33: #{_fourier_pe.1} parent=1 // pred_fallthru
      _
    // Predicated region
    $region34: #{_fourier_pe.1} parent=1 // pred_check
      _
    $region35: #{_fourier_pe.1} parent=1 // pred_check_branch
      %84 = sbr.rel (0) target = $region37
    $region36: #{_fourier_pe.1} parent=1 // pred_region
      %85 = dma.done [#allocation6], 256
    $region37: #{_fourier_pe.1} parent=1 // pred_fallthru
      _
    // Predicated region
    $region38: #{_fourier_pe.1} parent=1 // pred_check
      _
    $region39: #{_fourier_pe.1} parent=1 // pred_check_branch
      %87 = sbr.rel (0) target = $region41
    $region40: #{_fourier_pe.1} parent=1 // pred_region
      %88 = dma.done [#allocation6], 1024
    $region41: #{_fourier_pe.1} parent=1 // pred_fallthru
      _
    // Predicated region
    $region42: #{_fourier_pe.1} parent=1 // pred_check
      _
    $region43: #{_fourier_pe.1} parent=1 // pred_check_branch
      %90 = sbr.rel (0) target = $region45
    $region44: #{_fourier_pe.1} parent=1 // pred_region
      %91 = dma.done [#allocation9], 1024
    $region45: #{_fourier_pe.1} parent=1 // pred_fallthru
      _
    // Predicated region
    $region46: #{_fourier_pe.1} parent=1 // pred_check
      _
    $region47: #{_fourier_pe.1} parent=1 // pred_check_branch
      %93 = sbr.rel (0) target = $region49
    $region48: #{_fourier_pe.1} parent=1 // pred_region
      %94 = dma.done [#allocation9], 1024
    $region49: #{_fourier_pe.1} parent=1 // pred_fallthru
      _
    %v96 = vld [vmem:[#allocation2] sm:$0xff]
    %v97 = vld [vmem:[#allocation2 + $0x8] sm:$0xff]
    %v98 = vpack.c.bf16 %v97, %v96
    %v99 = vld [vmem:[#allocation5] sm:$0xf]
    %v100 = vld [vmem:[#allocation5 + $0x4] sm:$0xf]
    %v101 = vld [vmem:[#allocation5 + $0x8] sm:$0xf]
    %v102 = vld [vmem:[#allocation5 + $0xc] sm:$0x1]
    %v107 = vunpack.c.l.b16 %v99
    %v108 = vunpack.c.l.b16 %v100
    %v109 = vunpack.c.l.b16 %v101
    %v110 = vunpack.c.l.b16 %v102
    %v111 = vpack.c.b16 %v108, %v107
    %v112 = vpack.c.b16 %v110, %v109
    %vm114 = vcmask 203776
    %v116 = vsel %vm114, %v98, 0
    %vm118 = vcmask 1043456
    %vm119 = vcmask 1044480
    %v120 = vsel %vm118, 4294967295, 65535
    %v121 = vsel %vm119, %v120, 0
    %v123 = vand.u32 %v112, %v121
    %125 = vmatprep.subr.bf16.mxu0 0
    %126 = vmatpush1.bf16.msra.mxu0 %v111
    %127 = vmatprep.subr.bf16.mxu0 0
    %128 = vmatpush1.bf16.msra.mxu0 %v123
    %129 = vmatprep.subr.bf16.mxu0 0
    %130 = vmatpush1.bf16.msra.mxu0 0
    %131 = vmatprep.subr.bf16.mxu0 0
    %132 = vmatpush1.bf16.msra.mxu0 0
    %133 = vmatprep.subr.bf16.mxu0 0
    %134 = vmatpush1.bf16.msra.mxu0 0
    %135 = vmatprep.subr.bf16.mxu0 0
    %136 = vmatpush1.bf16.msra.mxu0 0
    %137 = vmatprep.subr.bf16.mxu0 0
    %138 = vmatpush1.bf16.msra.mxu0 0
    %139 = vmatprep.subr.bf16.mxu0 0
    %140 = vmatpush1.bf16.msra.mxu0 0
    %141 = vmatprep.subr.bf16.mxu0 0
    %142 = vmatpush1.bf16.msra.mxu0 0
    %143 = vmatprep.subr.bf16.mxu0 0
    %144 = vmatpush1.bf16.msra.mxu0 0
    %145 = vmatprep.subr.bf16.mxu0 0
    %146 = vmatpush1.bf16.msra.mxu0 0
    %147 = vmatprep.subr.bf16.mxu0 0
    %148 = vmatpush1.bf16.msra.mxu0 0
    %149 = vmatprep.subr.bf16.mxu0 0
    %150 = vmatpush1.bf16.msra.mxu0 0
    %151 = vmatprep.subr.bf16.mxu0 0
    %152 = vmatpush1.bf16.msra.mxu0 0
    %153 = vmatprep.subr.bf16.mxu0 0
    %154 = vmatpush1.bf16.msra.mxu0 0
    %155 = vmatprep.subr.bf16.mxu0 0
    %156 = vmatpush1.bf16.msra.mxu0 0
    %157 = vmatprep.mubr.bf16.mxu0 0
    %158 = vmatmul.mubr.bf16.gmra.mrb[0].mxu0 %v116
    %v159 = vpop.f32.mrb[0].mxu0
    %v160 = vadd.f32 0.0, %v159
    %v161 = vpop.f32.mrb[0].mxu0
    %v162 = vpop.f32.mrb[0].mxu0
    %v163 = vadd.f32 0.0, %v162
    %v164 = vpop.f32.mrb[0].mxu0
    %165 = vdwg.mxu0
    %v166 = vand.u32 2147483647, %v160
    %vm167 = vcmp.le.f32.partialorder %v166, 0.7853982
    %vm168 = vcmp.lt.s32.totalorder %v160, 0
    %v169 = vand.u32 %v160, 2139095040
    %v170 = vshrl.u32 %v169, 23
    %v171 = vsub.s32 %v170, 127
    %v172 = vand.u32 2147483647, %v160
    %v173 = vand.u32 %v172, 8388607
    %v174 = vor.u32 %v173, 8388608
    %v175 = vsub.s32 0, %v174
    %v176 = vadd.s32 %v171, 1
    %vm177 = vcmp.gt.s32.totalorder %v176, 0
    %v178 = vsel %vm177, %v176, 0
    %v179 = vshrl.u32 %v178, 5
    %v180 = vand.u32 %v178, 31
    %v181 = vsub.s32 32, %v180
    %v182 = vshrl.u32 683565275, %v181
    %v183 = vshll.u32 683565275, %v180
    %v184 = vshrl.u32 2475754826, %v181
    %v185 = vor.u32 %v183, %v184
    %v186 = vshll.u32 2475754826, %v180
    %v187 = vshrl.u32 2131351028, %v181
    %v188 = vor.u32 %v186, %v187
    %v189 = vshll.u32 2131351028, %v180
    %v190 = vshrl.u32 2102212464, %v181
    %v191 = vor.u32 %v189, %v190
    %v192 = vshll.u32 2102212464, %v180
    %v193 = vshrl.u32 920167782, %v181
    %v194 = vor.u32 %v192, %v193
    %v195 = vshll.u32 920167782, %v180
    %v196 = vshrl.u32 1326507024, %v181
    %v197 = vor.u32 %v195, %v196
    %vm198 = vcmp.lt.s32.totalorder %v179, 1
    %vm199 = vcmp.lt.s32.totalorder %v179, 2
    %vm200 = vcmp.lt.s32.totalorder %v179, 3
    %vm201 = vcmp.lt.s32.totalorder %v179, 4
    %v202 = vsel %vm198, %v182, %v185
    %v203 = vsel %vm201, %v191, 2102212464
    %v204 = vsel %vm200, %v188, %v203
    %v205 = vsel %vm199, %v202, %v204
    %v206 = vsel %vm198, %v185, %v188
    %v207 = vsel %vm201, %v194, 920167782
    %v208 = vsel %vm200, %v191, %v207
    %v209 = vsel %vm199, %v206, %v208
    %v210 = vsel %vm198, %v188, %v191
    %v211 = vsel %vm201, %v197, 1326507024
    %v212 = vsel %vm200, %v194, %v211
    %v213 = vsel %vm199, %v210, %v212
    %v214 = vshll.u32 %v174, 8
    %v215 = vmul.u32.u64.compose %v214, %v213
    %v216 = vextract.low.u32 %v215
    %v217 = vextract.high.u32 %v215
    %v218 = vmul.u32.u64.compose %v214, %v209
    %v219 = vextract.low.u32 %v218
    %v220 = vextract.high.u32 %v218
    %v221 = vmul.u32 %v214, %v205
    %v222 = vadd.s32 %v217, %v219
    %vm223 = vc.u32 %v217, %v219
    %v224 = vadd.s32 %v220, 1
    %v225 = vsel %vm223, %v224, %v220
    %v226 = vadd.s32 %v221, %v225
    %v227 = vadd.s32 %v226, 536870912
    %v228 = vshrl.u32 %v227, 30
    %v229 = vshll.u32 %v228, 30
    %v230 = vsub.s32 %v226, %v229
    %vm231 = vcmp.lt.s32.totalorder %v230, 0
    %v232 = vsub.s32 0, %v230
    %v233 = vsel %vm231, %v232, %v230
    %v234 = vclz %v233
    %v235 = vsub.s32 %v234, 2
    %vm236 = vcmp.gt.s32.totalorder 0, %v235
    %v237 = vsel %vm236, 0, %v235
    %v238 = vsub.s32 32, %v237
    %v239 = vshll.u32 %v230, %v237
    %v240 = vshrl.u32 %v222, %v238
    %v241 = vor.u32 %v239, %v240
    %v242 = vsub.s32 4294967266, %v237
    %v243 = vadd.s32 %v242, 127
    %v244 = vshll.u32 %v243, 23
    %v245 = vor.u32 4788187, %v244
    %v246 = vand.u32 2147483647, %v245
    %v248 = vcvt.s32.f32 %v241
    %v249 = vmul.f32 %v248, %v246
    %v250 = vxor.u32 %v249, 2147483648
    %v251 = vsel %vm168, %v250, %v249
    %v252 = vsub.s32 4, %v228
    %v253 = vsel %vm168, %v252, %v228
    %v254 = vsel %vm167, %v160, %v251
    %v255 = vsel %vm167, 0, %v253
    %v256 = vcosq.f32.pop %v254
    %v257 = vsinq.f32.pop %v254
    %vm258 = vweird.f32 %v160
    %v259 = vand.u32 %v255, 3
    %vm260 = vcmp.lt.s32.totalorder %v259, 2
    %vm261 = vcmp.eq.s32.totalorder %v259, 0
    %v262 = vxor.u32 %v257, 2147483648
    %v263 = vsel %vm261, %v256, %v262
    %vm264 = vcmp.eq.s32.totalorder %v259, 2
    %v265 = vxor.u32 %v256, 2147483648
    %v266 = vsel %vm264, %v265, %v257
    %v267 = vsel %vm260, %v263, %v266
    %v268 = vsel %vm258, nan, %v267
    %v269 = vand.u32 2147483647, %v163
    %vm270 = vcmp.le.f32.partialorder %v269, 0.7853982
    %vm271 = vcmp.lt.s32.totalorder %v163, 0
    %v272 = vand.u32 %v163, 2139095040
    %v273 = vshrl.u32 %v272, 23
    %v274 = vsub.s32 %v273, 127
    %v275 = vand.u32 2147483647, %v163
    %v276 = vand.u32 %v275, 8388607
    %v277 = vor.u32 %v276, 8388608
    %v278 = vsub.s32 0, %v277
    %v279 = vadd.s32 %v274, 1
    %vm280 = vcmp.gt.s32.totalorder %v279, 0
    %v281 = vsel %vm280, %v279, 0
    %v282 = vshrl.u32 %v281, 5
    %v283 = vand.u32 %v281, 31
    %v284 = vsub.s32 32, %v283
    %v285 = vshrl.u32 683565275, %v284
    %v286 = vshll.u32 683565275, %v283
    %v287 = vshrl.u32 2475754826, %v284
    %v288 = vor.u32 %v286, %v287
    %v289 = vshll.u32 2475754826, %v283
    %v290 = vshrl.u32 2131351028, %v284
    %v291 = vor.u32 %v289, %v290
    %v292 = vshll.u32 2131351028, %v283
    %v293 = vshrl.u32 2102212464, %v284
    %v294 = vor.u32 %v292, %v293
    %v295 = vshll.u32 2102212464, %v283
    %v296 = vshrl.u32 920167782, %v284
    %v297 = vor.u32 %v295, %v296
    %v298 = vshll.u32 920167782, %v283
    %v299 = vshrl.u32 1326507024, %v284
    %v300 = vor.u32 %v298, %v299
    %vm301 = vcmp.lt.s32.totalorder %v282, 1
    %vm302 = vcmp.lt.s32.totalorder %v282, 2
    %vm303 = vcmp.lt.s32.totalorder %v282, 3
    %vm304 = vcmp.lt.s32.totalorder %v282, 4
    %v305 = vsel %vm301, %v285, %v288
    %v306 = vsel %vm304, %v294, 2102212464
    %v307 = vsel %vm303, %v291, %v306
    %v308 = vsel %vm302, %v305, %v307
    %v309 = vsel %vm301, %v288, %v291
    %v310 = vsel %vm304, %v297, 920167782
    %v311 = vsel %vm303, %v294, %v310
    %v312 = vsel %vm302, %v309, %v311
    %v313 = vsel %vm301, %v291, %v294
    %v314 = vsel %vm304, %v300, 1326507024
    %v315 = vsel %vm303, %v297, %v314
    %v316 = vsel %vm302, %v313, %v315
    %v317 = vshll.u32 %v277, 8
    %v318 = vmul.u32.u64.compose %v317, %v316
    %v319 = vextract.low.u32 %v318
    %v320 = vextract.high.u32 %v318
    %v321 = vmul.u32.u64.compose %v317, %v312
    %v322 = vextract.low.u32 %v321
    %v323 = vextract.high.u32 %v321
    %v324 = vmul.u32 %v317, %v308
    %v325 = vadd.s32 %v320, %v322
    %vm326 = vc.u32 %v320, %v322
    %v327 = vadd.s32 %v323, 1
    %v328 = vsel %vm326, %v327, %v323
    %v329 = vadd.s32 %v324, %v328
    %v330 = vadd.s32 %v329, 536870912
    %v331 = vshrl.u32 %v330, 30
    %v332 = vshll.u32 %v331, 30
    %v333 = vsub.s32 %v329, %v332
    %vm334 = vcmp.lt.s32.totalorder %v333, 0
    %v335 = vsub.s32 0, %v333
    %v336 = vsel %vm334, %v335, %v333
    %v337 = vclz %v336
    %v338 = vsub.s32 %v337, 2
    %vm339 = vcmp.gt.s32.totalorder 0, %v338
    %v340 = vsel %vm339, 0, %v338
    %v341 = vsub.s32 32, %v340
    %v342 = vshll.u32 %v333, %v340
    %v343 = vshrl.u32 %v325, %v341
    %v344 = vor.u32 %v342, %v343
    %v345 = vsub.s32 4294967266, %v340
    %v346 = vadd.s32 %v345, 127
    %v347 = vshll.u32 %v346, 23
    %v348 = vor.u32 4788187, %v347
    %v349 = vand.u32 2147483647, %v348
    %v351 = vcvt.s32.f32 %v344
    %v352 = vmul.f32 %v351, %v349
    %v353 = vxor.u32 %v352, 2147483648
    %v354 = vsel %vm271, %v353, %v352
    %v355 = vsub.s32 4, %v331
    %v356 = vsel %vm271, %v355, %v331
    %v357 = vsel %vm270, %v163, %v354
    %v358 = vsel %vm270, 0, %v356
    %v359 = vcosq.f32.pop %v357
    %v360 = vsinq.f32.pop %v357
    %vm361 = vweird.f32 %v163
    %v362 = vand.u32 %v358, 3
    %vm363 = vcmp.lt.s32.totalorder %v362, 2
    %vm364 = vcmp.eq.s32.totalorder %v362, 0
    %v365 = vxor.u32 %v360, 2147483648
    %v366 = vsel %vm364, %v359, %v365
    %vm367 = vcmp.eq.s32.totalorder %v362, 2
    %v368 = vxor.u32 %v359, 2147483648
    %v369 = vsel %vm367, %v368, %v360
    %v370 = vsel %vm363, %v366, %v369
    %v371 = vsel %vm361, nan, %v370
    %v372 = vand.u32 2147483647, %v160
    %vm373 = vcmp.le.f32.partialorder %v372, 0.7853982
    %vm374 = vcmp.lt.s32.totalorder %v160, 0
    %v375 = vand.u32 %v160, 2139095040
    %v376 = vshrl.u32 %v375, 23
    %v377 = vsub.s32 %v376, 127
    %v378 = vand.u32 2147483647, %v160
    %v379 = vand.u32 %v378, 8388607
    %v380 = vor.u32 %v379, 8388608
    %v381 = vsub.s32 0, %v380
    %v382 = vadd.s32 %v377, 1
    %vm383 = vcmp.gt.s32.totalorder %v382, 0
    %v384 = vsel %vm383, %v382, 0
    %v385 = vshrl.u32 %v384, 5
    %v386 = vand.u32 %v384, 31
    %v387 = vsub.s32 32, %v386
    %v388 = vshrl.u32 683565275, %v387
    %v389 = vshll.u32 683565275, %v386
    %v390 = vshrl.u32 2475754826, %v387
    %v391 = vor.u32 %v389, %v390
    %v392 = vshll.u32 2475754826, %v386
    %v393 = vshrl.u32 2131351028, %v387
    %v394 = vor.u32 %v392, %v393
    %v395 = vshll.u32 2131351028, %v386
    %v396 = vshrl.u32 2102212464, %v387
    %v397 = vor.u32 %v395, %v396
    %v398 = vshll.u32 2102212464, %v386
    %v399 = vshrl.u32 920167782, %v387
    %v400 = vor.u32 %v398, %v399
    %v401 = vshll.u32 920167782, %v386
    %v402 = vshrl.u32 1326507024, %v387
    %v403 = vor.u32 %v401, %v402
    %vm404 = vcmp.lt.s32.totalorder %v385, 1
    %vm405 = vcmp.lt.s32.totalorder %v385, 2
    %vm406 = vcmp.lt.s32.totalorder %v385, 3
    %vm407 = vcmp.lt.s32.totalorder %v385, 4
    %v408 = vsel %vm404, %v388, %v391
    %v409 = vsel %vm407, %v397, 2102212464
    %v410 = vsel %vm406, %v394, %v409
    %v411 = vsel %vm405, %v408, %v410
    %v412 = vsel %vm404, %v391, %v394
    %v413 = vsel %vm407, %v400, 920167782
    %v414 = vsel %vm406, %v397, %v413
    %v415 = vsel %vm405, %v412, %v414
    %v416 = vsel %vm404, %v394, %v397
    %v417 = vsel %vm407, %v403, 1326507024
    %v418 = vsel %vm406, %v400, %v417
    %v419 = vsel %vm405, %v416, %v418
    %v420 = vshll.u32 %v380, 8
    %v421 = vmul.u32.u64.compose %v420, %v419
    %v422 = vextract.low.u32 %v421
    %v423 = vextract.high.u32 %v421
    %v424 = vmul.u32.u64.compose %v420, %v415
    %v425 = vextract.low.u32 %v424
    %v426 = vextract.high.u32 %v424
    %v427 = vmul.u32 %v420, %v411
    %v428 = vadd.s32 %v423, %v425
    %vm429 = vc.u32 %v423, %v425
    %v430 = vadd.s32 %v426, 1
    %v431 = vsel %vm429, %v430, %v426
    %v432 = vadd.s32 %v427, %v431
    %v433 = vadd.s32 %v432, 536870912
    %v434 = vshrl.u32 %v433, 30
    %v435 = vshll.u32 %v434, 30
    %v436 = vsub.s32 %v432, %v435
    %vm437 = vcmp.lt.s32.totalorder %v436, 0
    %v438 = vsub.s32 0, %v436
    %v439 = vsel %vm437, %v438, %v436
    %v440 = vclz %v439
    %v441 = vsub.s32 %v440, 2
    %vm442 = vcmp.gt.s32.totalorder 0, %v441
    %v443 = vsel %vm442, 0, %v441
    %v444 = vsub.s32 32, %v443
    %v445 = vshll.u32 %v436, %v443
    %v446 = vshrl.u32 %v428, %v444
    %v447 = vor.u32 %v445, %v446
    %v448 = vsub.s32 4294967266, %v443
    %v449 = vadd.s32 %v448, 127
    %v450 = vshll.u32 %v449, 23
    %v451 = vor.u32 4788187, %v450
    %v452 = vand.u32 2147483647, %v451
    %v454 = vcvt.s32.f32 %v447
    %v455 = vmul.f32 %v454, %v452
    %v456 = vxor.u32 %v455, 2147483648
    %v457 = vsel %vm374, %v456, %v455
    %v458 = vsub.s32 4, %v434
    %v459 = vsel %vm374, %v458, %v434
    %v460 = vsel %vm373, %v160, %v457
    %v461 = vsel %vm373, 0, %v459
    %v462 = vcosq.f32.pop %v460
    %v463 = vsinq.f32.pop %v460
    %vm464 = vweird.f32 %v160
    %v465 = vadd.s32 %v461, 3
    %v466 = vand.u32 %v465, 3
    %vm467 = vcmp.lt.s32.totalorder %v466, 2
    %vm468 = vcmp.eq.s32.totalorder %v466, 0
    %v469 = vxor.u32 %v463, 2147483648
    %v470 = vsel %vm468, %v462, %v469
    %vm471 = vcmp.eq.s32.totalorder %v466, 2
    %v472 = vxor.u32 %v462, 2147483648
    %v473 = vsel %vm471, %v472, %v463
    %v474 = vsel %vm467, %v470, %v473
    %v475 = vsel %vm464, nan, %v474
    %v476 = vand.u32 2147483647, %v163
    %vm477 = vcmp.le.f32.partialorder %v476, 0.7853982
    %vm478 = vcmp.lt.s32.totalorder %v163, 0
    %v479 = vand.u32 %v163, 2139095040
    %v480 = vshrl.u32 %v479, 23
    %v481 = vsub.s32 %v480, 127
    %v482 = vand.u32 2147483647, %v163
    %v483 = vand.u32 %v482, 8388607
    %v484 = vor.u32 %v483, 8388608
    %v485 = vsub.s32 0, %v484
    %v486 = vadd.s32 %v481, 1
    %vm487 = vcmp.gt.s32.totalorder %v486, 0
    %v488 = vsel %vm487, %v486, 0
    %v489 = vshrl.u32 %v488, 5
    %v490 = vand.u32 %v488, 31
    %v491 = vsub.s32 32, %v490
    %v492 = vshrl.u32 683565275, %v491
    %v493 = vshll.u32 683565275, %v490
    %v494 = vshrl.u32 2475754826, %v491
    %v495 = vor.u32 %v493, %v494
    %v496 = vshll.u32 2475754826, %v490
    %v497 = vshrl.u32 2131351028, %v491
    %v498 = vor.u32 %v496, %v497
    %v499 = vshll.u32 2131351028, %v490
    %v500 = vshrl.u32 2102212464, %v491
    %v501 = vor.u32 %v499, %v500
    %v502 = vshll.u32 2102212464, %v490
    %v503 = vshrl.u32 920167782, %v491
    %v504 = vor.u32 %v502, %v503
    %v505 = vshll.u32 920167782, %v490
    %v506 = vshrl.u32 1326507024, %v491
    %v507 = vor.u32 %v505, %v506
    %vm508 = vcmp.lt.s32.totalorder %v489, 1
    %vm509 = vcmp.lt.s32.totalorder %v489, 2
    %vm510 = vcmp.lt.s32.totalorder %v489, 3
    %vm511 = vcmp.lt.s32.totalorder %v489, 4
    %v512 = vsel %vm508, %v492, %v495
    %v513 = vsel %vm511, %v501, 2102212464
    %v514 = vsel %vm510, %v498, %v513
    %v515 = vsel %vm509, %v512, %v514
    %v516 = vsel %vm508, %v495, %v498
    %v517 = vsel %vm511, %v504, 920167782
    %v518 = vsel %vm510, %v501, %v517
    %v519 = vsel %vm509, %v516, %v518
    %v520 = vsel %vm508, %v498, %v501
    %v521 = vsel %vm511, %v507, 1326507024
    %v522 = vsel %vm510, %v504, %v521
    %v523 = vsel %vm509, %v520, %v522
    %v524 = vshll.u32 %v484, 8
    %v525 = vmul.u32.u64.compose %v524, %v523
    %v526 = vextract.low.u32 %v525
    %v527 = vextract.high.u32 %v525
    %v528 = vmul.u32.u64.compose %v524, %v519
    %v529 = vextract.low.u32 %v528
    %v530 = vextract.high.u32 %v528
    %v531 = vmul.u32 %v524, %v515
    %v532 = vadd.s32 %v527, %v529
    %vm533 = vc.u32 %v527, %v529
    %v534 = vadd.s32 %v530, 1
    %v535 = vsel %vm533, %v534, %v530
    %v536 = vadd.s32 %v531, %v535
    %v537 = vadd.s32 %v536, 536870912
    %v538 = vshrl.u32 %v537, 30
    %v539 = vshll.u32 %v538, 30
    %v540 = vsub.s32 %v536, %v539
    %vm541 = vcmp.lt.s32.totalorder %v540, 0
    %v542 = vsub.s32 0, %v540
    %v543 = vsel %vm541, %v542, %v540
    %v544 = vclz %v543
    %v545 = vsub.s32 %v544, 2
    %vm546 = vcmp.gt.s32.totalorder 0, %v545
    %v547 = vsel %vm546, 0, %v545
    %v548 = vsub.s32 32, %v547
    %v549 = vshll.u32 %v540, %v547
    %v550 = vshrl.u32 %v532, %v548
    %v551 = vor.u32 %v549, %v550
    %v552 = vsub.s32 4294967266, %v547
    %v553 = vadd.s32 %v552, 127
    %v554 = vshll.u32 %v553, 23
    %v555 = vor.u32 4788187, %v554
    %v556 = vand.u32 2147483647, %v555
    %v558 = vcvt.s32.f32 %v551
    %v559 = vmul.f32 %v558, %v556
    %v560 = vxor.u32 %v559, 2147483648
    %v561 = vsel %vm478, %v560, %v559
    %v562 = vsub.s32 4, %v538
    %v563 = vsel %vm478, %v562, %v538
    %v564 = vsel %vm477, %v163, %v561
    %v565 = vsel %vm477, 0, %v563
    %v566 = vcosq.f32.pop %v564
    %v567 = vsinq.f32.pop %v564
    %vm568 = vweird.f32 %v163
    %v569 = vadd.s32 %v565, 3
    %v570 = vand.u32 %v569, 3
    %vm571 = vcmp.lt.s32.totalorder %v570, 2
    %vm572 = vcmp.eq.s32.totalorder %v570, 0
    %v573 = vxor.u32 %v567, 2147483648
    %v574 = vsel %vm572, %v566, %v573
    %vm575 = vcmp.eq.s32.totalorder %v570, 2
    %v576 = vxor.u32 %v566, 2147483648
    %v577 = vsel %vm575, %v576, %v567
    %v578 = vsel %vm571, %v574, %v577
    %v579 = vsel %vm568, nan, %v578
    %v580 = vpack.c.bf16 %v371, %v268
    %v581 = vld [vmem:[#allocation7] sm:$0xf]
    %v582 = vld [vmem:[#allocation7 + $0x4] sm:$0xf]
    %v583 = vld [vmem:[#allocation7 + $0x8] sm:$0xf]
    %v584 = vld [vmem:[#allocation7 + $0xc] sm:$0xf]
    %v585 = vld [vmem:[#allocation7 + $0x10] sm:$0xf]
    %v586 = vld [vmem:[#allocation7 + $0x14] sm:$0xf]
    %v587 = vld [vmem:[#allocation7 + $0x18] sm:$0xf]
    %v588 = vld [vmem:[#allocation7 + $0x1c] sm:$0xf]
    %v589 = vld [vmem:[#allocation7 + $0x20] sm:$0xf]
    %v590 = vld [vmem:[#allocation7 + $0x24] sm:$0xf]
    %v591 = vld [vmem:[#allocation7 + $0x28] sm:$0xf]
    %v592 = vld [vmem:[#allocation7 + $0x2c] sm:$0xf]
    %v593 = vld [vmem:[#allocation7 + $0x30] sm:$0xf]
    %v594 = vld [vmem:[#allocation7 + $0x34] sm:$0xf]
    %v595 = vld [vmem:[#allocation7 + $0x38] sm:$0xf]
    %v596 = vld [vmem:[#allocation7 + $0x3c] sm:$0xf]
    %v597 = vpack.c.bf16 %v579, %v475
    %v598 = vld [vmem:[#allocation8] sm:$0xf]
    %v599 = vld [vmem:[#allocation8 + $0x4] sm:$0xf]
    %v600 = vld [vmem:[#allocation8 + $0x8] sm:$0xf]
    %v601 = vld [vmem:[#allocation8 + $0xc] sm:$0xf]
    %v602 = vld [vmem:[#allocation8 + $0x10] sm:$0xf]
    %v603 = vld [vmem:[#allocation8 + $0x14] sm:$0xf]
    %v604 = vld [vmem:[#allocation8 + $0x18] sm:$0xf]
    %v605 = vld [vmem:[#allocation8 + $0x1c] sm:$0xf]
    %v606 = vld [vmem:[#allocation8 + $0x20] sm:$0xf]
    %v607 = vld [vmem:[#allocation8 + $0x24] sm:$0xf]
    %v608 = vld [vmem:[#allocation8 + $0x28] sm:$0xf]
    %v609 = vld [vmem:[#allocation8 + $0x2c] sm:$0xf]
    %v610 = vld [vmem:[#allocation8 + $0x30] sm:$0xf]
    %v611 = vld [vmem:[#allocation8 + $0x34] sm:$0xf]
    %v612 = vld [vmem:[#allocation8 + $0x38] sm:$0xf]
    %v613 = vld [vmem:[#allocation8 + $0x3c] sm:$0xf]
    %v630 = vunpack.c.l.b16 %v598
    %v631 = vunpack.c.l.b16 %v599
    %v632 = vunpack.c.l.b16 %v600
    %v633 = vunpack.c.l.b16 %v601
    %v634 = vunpack.c.l.b16 %v602
    %v635 = vunpack.c.l.b16 %v603
    %v636 = vunpack.c.l.b16 %v604
    %v637 = vunpack.c.l.b16 %v605
    %v638 = vunpack.c.l.b16 %v606
    %v639 = vunpack.c.l.b16 %v607
    %v640 = vunpack.c.l.b16 %v608
    %v641 = vunpack.c.l.b16 %v609
    %v642 = vunpack.c.l.b16 %v610
    %v643 = vunpack.c.l.b16 %v611
    %v644 = vunpack.c.l.b16 %v612
    %v645 = vunpack.c.l.b16 %v613
    %v646 = vpack.c.b16 %v631, %v630
    %v647 = vpack.c.b16 %v633, %v632
    %v648 = vpack.c.b16 %v635, %v634
    %v649 = vpack.c.b16 %v637, %v636
    %v650 = vpack.c.b16 %v639, %v638
    %v651 = vpack.c.b16 %v641, %v640
    %v652 = vpack.c.b16 %v643, %v642
    %v653 = vpack.c.b16 %v645, %v644
    %662 = vmatprep.subr.bf16.mxu0 0
    %663 = vmatpush1.bf16.msra.mxu0 %v646
    %664 = vmatprep.subr.bf16.mxu0 0
    %665 = vmatpush1.bf16.msra.mxu0 %v647
    %666 = vmatprep.subr.bf16.mxu0 0
    %667 = vmatpush1.bf16.msra.mxu0 %v648
    %668 = vmatprep.subr.bf16.mxu0 0
    %669 = vmatpush1.bf16.msra.mxu0 %v649
    %670 = vmatprep.subr.bf16.mxu0 0
    %671 = vmatpush1.bf16.msra.mxu0 %v650
    %672 = vmatprep.subr.bf16.mxu0 0
    %673 = vmatpush1.bf16.msra.mxu0 %v651
    %674 = vmatprep.subr.bf16.mxu0 0
    %675 = vmatpush1.bf16.msra.mxu0 %v652
    %676 = vmatprep.subr.bf16.mxu0 0
    %677 = vmatpush1.bf16.msra.mxu0 %v653
    %678 = vmatprep.subr.bf16.mxu0 0
    %679 = vmatpush1.bf16.msra.mxu0 0
    %680 = vmatprep.subr.bf16.mxu0 0
    %681 = vmatpush1.bf16.msra.mxu0 0
    %682 = vmatprep.subr.bf16.mxu0 0
    %683 = vmatpush1.bf16.msra.mxu0 0
    %684 = vmatprep.subr.bf16.mxu0 0
    %685 = vmatpush1.bf16.msra.mxu0 0
    %686 = vmatprep.subr.bf16.mxu0 0
    %687 = vmatpush1.bf16.msra.mxu0 0
    %688 = vmatprep.subr.bf16.mxu0 0
    %689 = vmatpush1.bf16.msra.mxu0 0
    %690 = vmatprep.subr.bf16.mxu0 0
    %691 = vmatpush1.bf16.msra.mxu0 0
    %692 = vmatprep.subr.bf16.mxu0 0
    %693 = vmatpush1.bf16.msra.mxu0 0
    %694 = vmatprep.mubr.bf16.mxu0 0
    %695 = vmatmul.mubr.bf16.gmra.mrb[0].mxu0 %v597
    %v696 = vpop.f32.mrb[0].mxu0
    %v697 = vadd.f32 0.0, %v696
    %v698 = vpop.f32.mrb[0].mxu0
    %v699 = vpop.f32.mrb[0].mxu0
    %v700 = vadd.f32 0.0, %v699
    %v701 = vpop.f32.mrb[0].mxu0
    %702 = vdwg.mxu0
    %v719 = vunpack.c.l.b16 %v581
    %v720 = vunpack.c.l.b16 %v582
    %v721 = vunpack.c.l.b16 %v583
    %v722 = vunpack.c.l.b16 %v584
    %v723 = vunpack.c.l.b16 %v585
    %v724 = vunpack.c.l.b16 %v586
    %v725 = vunpack.c.l.b16 %v587
    %v726 = vunpack.c.l.b16 %v588
    %v727 = vunpack.c.l.b16 %v589
    %v728 = vunpack.c.l.b16 %v590
    %v729 = vunpack.c.l.b16 %v591
    %v730 = vunpack.c.l.b16 %v592
    %v731 = vunpack.c.l.b16 %v593
    %v732 = vunpack.c.l.b16 %v594
    %v733 = vunpack.c.l.b16 %v595
    %v734 = vunpack.c.l.b16 %v596
    %v735 = vpack.c.b16 %v720, %v719
    %v736 = vpack.c.b16 %v722, %v721
    %v737 = vpack.c.b16 %v724, %v723
    %v738 = vpack.c.b16 %v726, %v725
    %v739 = vpack.c.b16 %v728, %v727
    %v740 = vpack.c.b16 %v730, %v729
    %v741 = vpack.c.b16 %v732, %v731
    %v742 = vpack.c.b16 %v734, %v733
    %751 = vmatprep.subr.bf16.mxu0 0
    %752 = vmatpush1.bf16.msra.mxu0 %v735
    %753 = vmatprep.subr.bf16.mxu0 0
    %754 = vmatpush1.bf16.msra.mxu0 %v736
    %755 = vmatprep.subr.bf16.mxu0 0
    %756 = vmatpush1.bf16.msra.mxu0 %v737
    %757 = vmatprep.subr.bf16.mxu0 0
    %758 = vmatpush1.bf16.msra.mxu0 %v738
    %759 = vmatprep.subr.bf16.mxu0 0
    %760 = vmatpush1.bf16.msra.mxu0 %v739
    %761 = vmatprep.subr.bf16.mxu0 0
    %762 = vmatpush1.bf16.msra.mxu0 %v740
    %763 = vmatprep.subr.bf16.mxu0 0
    %764 = vmatpush1.bf16.msra.mxu0 %v741
    %765 = vmatprep.subr.bf16.mxu0 0
    %766 = vmatpush1.bf16.msra.mxu0 %v742
    %767 = vmatprep.subr.bf16.mxu0 0
    %768 = vmatpush1.bf16.msra.mxu0 0
    %769 = vmatprep.subr.bf16.mxu0 0
    %770 = vmatpush1.bf16.msra.mxu0 0
    %771 = vmatprep.subr.bf16.mxu0 0
    %772 = vmatpush1.bf16.msra.mxu0 0
    %773 = vmatprep.subr.bf16.mxu0 0
    %774 = vmatpush1.bf16.msra.mxu0 0
    %775 = vmatprep.subr.bf16.mxu0 0
    %776 = vmatpush1.bf16.msra.mxu0 0
    %777 = vmatprep.subr.bf16.mxu0 0
    %778 = vmatpush1.bf16.msra.mxu0 0
    %779 = vmatprep.subr.bf16.mxu0 0
    %780 = vmatpush1.bf16.msra.mxu0 0
    %781 = vmatprep.subr.bf16.mxu0 0
    %782 = vmatpush1.bf16.msra.mxu0 0
    %783 = vmatprep.mubr.bf16.mxu0 0
    %784 = vmatmul.mubr.bf16.gmra.mrb[0].mxu0 %v580
    %v785 = vpop.f32.mrb[0].mxu0
    %v786 = vadd.f32 %v697, %v785
    %v787 = vpop.f32.mrb[0].mxu0
    %v788 = vpop.f32.mrb[0].mxu0
    %v789 = vadd.f32 %v700, %v788
    %v790 = vpop.f32.mrb[0].mxu0
    %791 = vdwg.mxu0
    %v792 = vld [vmem:[%s4] sm:$0x1]
    %v794 = vlaneseq
    %v795 = vshrl.u32 %v794, 7
    %v796 = vsub.s32 0, %v795
    %v797 = vrot.slane %v792, %v796
    %v799 = vadd.f32 %v786, %v797
    %v800 = vadd.f32 %v789, %v797
    %v801 = vmul.f32 %v799, %v799
    %v802 = vmul.f32 %v800, %v800
    %v803 = vmul.f32 %v799, %v801
    %v804 = vmul.f32 %v800, %v802
    %v805 = vmul.f32 %v803, 0.044715
    %v806 = vmul.f32 %v804, 0.044715
    %v807 = vadd.f32 %v799, %v805
    %v808 = vadd.f32 %v800, %v806
    %v809 = vmul.f32 %v807, 0.7978846
    %v810 = vmul.f32 %v808, 0.7978846
    %v811 = vtanh.pop %v809
    %v812 = vtanh.pop %v810
    %v813 = vadd.f32 %v811, 1.0
    %v814 = vadd.f32 %v812, 1.0
    %v815 = vmul.f32 %v813, 0.5
    %v816 = vmul.f32 %v814, 0.5
    %v817 = vmul.f32 %v799, %v815
    %v818 = vmul.f32 %v800, %v816
    %v819 = vpack.c.bf16 %v818, %v817
    %v820 = vld [vmem:[#allocation10] sm:$0xf]
    %v821 = vld [vmem:[#allocation10 + $0x4] sm:$0xf]
    %v822 = vld [vmem:[#allocation10 + $0x8] sm:$0xf]
    %v823 = vld [vmem:[#allocation10 + $0xc] sm:$0xf]
    %v824 = vld [vmem:[#allocation10 + $0x10] sm:$0xf]
    %v825 = vld [vmem:[#allocation10 + $0x14] sm:$0xf]
    %v826 = vld [vmem:[#allocation10 + $0x18] sm:$0xf]
    %v827 = vld [vmem:[#allocation10 + $0x1c] sm:$0xf]
    %v828 = vld [vmem:[#allocation10 + $0x20] sm:$0xf]
    %v829 = vld [vmem:[#allocation10 + $0x24] sm:$0xf]
    %v830 = vld [vmem:[#allocation10 + $0x28] sm:$0xf]
    %v831 = vld [vmem:[#allocation10 + $0x2c] sm:$0xf]
    %v832 = vld [vmem:[#allocation10 + $0x30] sm:$0xf]
    %v833 = vld [vmem:[#allocation10 + $0x34] sm:$0xf]
    %v834 = vld [vmem:[#allocation10 + $0x38] sm:$0xf]
    %v835 = vld [vmem:[#allocation10 + $0x3c] sm:$0xf]
    %v836 = vld [vmem:[%s6] sm:$0x1]
    %v838 = vlaneseq
    %v839 = vshrl.u32 %v838, 7
    %v840 = vsub.s32 0, %v839
    %v841 = vrot.slane %v836, %v840
    %v859 = vunpack.c.l.b16 %v820
    %v860 = vunpack.c.l.b16 %v821
    %v861 = vunpack.c.l.b16 %v822
    %v862 = vunpack.c.l.b16 %v823
    %v863 = vunpack.c.l.b16 %v824
    %v864 = vunpack.c.l.b16 %v825
    %v865 = vunpack.c.l.b16 %v826
    %v866 = vunpack.c.l.b16 %v827
    %v867 = vunpack.c.l.b16 %v828
    %v868 = vunpack.c.l.b16 %v829
    %v869 = vunpack.c.l.b16 %v830
    %v870 = vunpack.c.l.b16 %v831
    %v871 = vunpack.c.l.b16 %v832
    %v872 = vunpack.c.l.b16 %v833
    %v873 = vunpack.c.l.b16 %v834
    %v874 = vunpack.c.l.b16 %v835
    %v875 = vpack.c.b16 %v860, %v859
    %v876 = vpack.c.b16 %v862, %v861
    %v877 = vpack.c.b16 %v864, %v863
    %v878 = vpack.c.b16 %v866, %v865
    %v879 = vpack.c.b16 %v868, %v867
    %v880 = vpack.c.b16 %v870, %v869
    %v881 = vpack.c.b16 %v872, %v871
    %v882 = vpack.c.b16 %v874, %v873
    %891 = vmatprep.subr.bf16.mxu0 0
    %892 = vmatpush1.bf16.msra.mxu0 %v875
    %893 = vmatprep.subr.bf16.mxu0 0
    %894 = vmatpush1.bf16.msra.mxu0 %v876
    %895 = vmatprep.subr.bf16.mxu0 0
    %896 = vmatpush1.bf16.msra.mxu0 %v877
    %897 = vmatprep.subr.bf16.mxu0 0
    %898 = vmatpush1.bf16.msra.mxu0 %v878
    %899 = vmatprep.subr.bf16.mxu0 0
    %900 = vmatpush1.bf16.msra.mxu0 %v879
    %901 = vmatprep.subr.bf16.mxu0 0
    %902 = vmatpush1.bf16.msra.mxu0 %v880
    %903 = vmatprep.subr.bf16.mxu0 0
    %904 = vmatpush1.bf16.msra.mxu0 %v881
    %905 = vmatprep.subr.bf16.mxu0 0
    %906 = vmatpush1.bf16.msra.mxu0 %v882
    %907 = vmatprep.subr.bf16.mxu0 0
    %908 = vmatpush1.bf16.msra.mxu0 0
    %909 = vmatprep.subr.bf16.mxu0 0
    %910 = vmatpush1.bf16.msra.mxu0 0
    %911 = vmatprep.subr.bf16.mxu0 0
    %912 = vmatpush1.bf16.msra.mxu0 0
    %913 = vmatprep.subr.bf16.mxu0 0
    %914 = vmatpush1.bf16.msra.mxu0 0
    %915 = vmatprep.subr.bf16.mxu0 0
    %916 = vmatpush1.bf16.msra.mxu0 0
    %917 = vmatprep.subr.bf16.mxu0 0
    %918 = vmatpush1.bf16.msra.mxu0 0
    %919 = vmatprep.subr.bf16.mxu0 0
    %920 = vmatpush1.bf16.msra.mxu0 0
    %921 = vmatprep.subr.bf16.mxu0 0
    %922 = vmatpush1.bf16.msra.mxu0 0
    %923 = vmatprep.mubr.bf16.mxu0 0
    %924 = vmatmul.mubr.bf16.gmra.mrb[0].mxu0 %v819
    %v925 = vpop.f32.mrb[0].mxu0
    %v926 = vadd.f32 %v841, %v925
    %v927 = vpop.f32.mrb[0].mxu0
    %v928 = vpop.f32.mrb[0].mxu0
    %v929 = vadd.f32 %v841, %v928
    %v930 = vpop.f32.mrb[0].mxu0
    %931 = vdwg.mxu0
    %932 = vst [vmem:[#allocation11] sm:$0xff] %v926
    %933 = vst [vmem:[#allocation11 + $0x8] sm:$0xff] %v929
    // Predicated region
    $region50: #{_fourier_pe.1} parent=1 // pred_check
      _
    $region51: #{_fourier_pe.1} parent=1 // pred_check_branch
      %935 = sbr.rel (0) target = $region53
    $region52: #{_fourier_pe.1} parent=1 // pred_region
      %s937 = ssub.s32 256, 256
      %938 = vsyncadd [#allocation4], %s937
      %s939 = sshll.u32 [#allocation11], 4
      %s940 = int_to_ptr.vmem [resolvable:$true] %s939
      %945 = dma.vmem_to_hbm [thread:$0]  %s940, 256, %s7, [#allocation4], 128, 128, 8
    $region53: #{_fourier_pe.1} parent=1 // pred_fallthru
      _
    // Predicated region
    $region54: #{_fourier_pe.1} parent=1 // pred_check
      _
    $region55: #{_fourier_pe.1} parent=1 // pred_check_branch
      %947 = sbr.rel (0) target = $region57
    $region56: #{_fourier_pe.1} parent=1 // pred_region
      %948 = dma.done [#allocation4], 256
    $region57: #{_fourier_pe.1} parent=1 // pred_fallthru
      _
    %949 = vsyncpa [#allocation3], 1
    %950 = vsyncpa [#allocation6], 1
    %951 = vsyncpa [#allocation9], 1
    %952 = vsyncpa [#allocation4], 1

</llo_original>
